<compile_context>
chip_gen: v6e
topology: v6e:2x2x1
jax: 0.10.0
libtpu: 0.0.40
codegen_flags: <defaults>
</compile_context>

<pallas_src>
import jax
import jax.numpy as jnp
from jax.experimental import pallas as pl
from jax.experimental.pallas import tpu as pltpu

HIDDEN = 64    # logical hidden size (matches the PyTorch module)
H_PAD = 128    # lane-padded hidden width
A_PAD = 128    # lane-padded action-head width


def _round_up(n, m):
    return ((n + m - 1) // m) * m


def dqn_kernel(x_ref, w1_ref, b1_ref, w2_ref, b2_ref, w3_ref, b3_ref, o_ref):
    # fc1 + ReLU : bf16 MXU inputs, f32 accumulate, f32 elementwise.
    h1 = jnp.dot(x_ref[...], w1_ref[...], preferred_element_type=jnp.float32)
    h1 = jnp.maximum(h1 + b1_ref[...], 0.0)
    # fc2 + ReLU : padded hidden lanes are exactly zero (zero w1 cols, zero b1 pad),
    # so they contribute nothing through the zero-padded w2 rows.
    h2 = jnp.dot(h1.astype(jnp.bfloat16), w2_ref[...],
                 preferred_element_type=jnp.float32)
    h2 = jnp.maximum(h2 + b2_ref[...], 0.0)
    # fc3 (Q-value head, no activation); padded action lanes stay zero.
    q = jnp.dot(h2.astype(jnp.bfloat16), w3_ref[...],
                preferred_element_type=jnp.float32)
    o_ref[...] = (q + b3_ref[...]).astype(o_ref.dtype)


def dqn_forward(x, params, *, tile_b=256):
    """Full DQN MLP in one Pallas kernel, tiled over the batch dimension."""
    w1, b1, w2, b2, w3, b3 = params   # logical (in,out)-layout weights, (1,out) biases
    batch, num_inputs = x.shape
    hidden = w1.shape[1]
    num_actions = w3.shape[1]

    # ---- lane-dense zero padding of the parameters (zeros propagate harmlessly) ----
    w1p = jnp.zeros((num_inputs, H_PAD), jnp.float32).at[:, :hidden].set(w1)
    b1p = jnp.zeros((1, H_PAD), jnp.float32).at[:, :hidden].set(b1)
    w2p = jnp.zeros((H_PAD, H_PAD), jnp.float32).at[:hidden, :hidden].set(w2)
    b2p = jnp.zeros((1, H_PAD), jnp.float32).at[:, :hidden].set(b2)
    w3p = jnp.zeros((H_PAD, A_PAD), jnp.float32).at[:hidden, :num_actions].set(w3)
    b3p = jnp.zeros((1, A_PAD), jnp.float32).at[:, :num_actions].set(b3)

    # ---- batch tiling: TILE_B multiple of 8, pad batch up to a whole number of tiles
    tb = min(tile_b, _round_up(batch, 8))
    padded_batch = _round_up(batch, tb)
    if padded_batch != batch:
        x = jnp.pad(x, ((0, padded_batch - batch), (0, 0)))
    grid = (padded_batch // tb,)

    # bf16 MXU inputs; biases stay f32 (bias add / ReLU done in f32 in-kernel).
    x_bf = x.astype(jnp.bfloat16)
    w1_bf = w1p.astype(jnp.bfloat16)
    w2_bf = w2p.astype(jnp.bfloat16)
    w3_bf = w3p.astype(jnp.bfloat16)

    flops = 2 * padded_batch * (num_inputs * H_PAD + H_PAD * H_PAD + H_PAD * A_PAD)
    bytes_accessed = (padded_batch * num_inputs * 2                       # x (bf16)
                      + (num_inputs + H_PAD) * H_PAD * 2 + H_PAD * A_PAD * 2  # weights (bf16)
                      + (2 * H_PAD + A_PAD) * 4                           # biases (f32)
                      + padded_batch * A_PAD * 4)                         # output (f32)

    const = lambda shape: pl.BlockSpec(shape, lambda i: (0, 0))  # VMEM-resident weights

    out = pl.pallas_call(
        dqn_kernel,
        out_shape=jax.ShapeDtypeStruct((padded_batch, A_PAD), jnp.float32),
        grid=grid,
        in_specs=[
            pl.BlockSpec((tb, num_inputs), lambda i: (i, 0)),   # x: tiled over batch
            const((num_inputs, H_PAD)), const((1, H_PAD)),      # w1, b1
            const((H_PAD, H_PAD)),      const((1, H_PAD)),      # w2, b2
            const((H_PAD, A_PAD)),      const((1, A_PAD)),      # w3, b3
        ],
        out_specs=pl.BlockSpec((tb, A_PAD), lambda i: (i, 0)),
        compiler_params=pltpu.CompilerParams(
            dimension_semantics=("parallel",),   # both TensorCores on v7x
            vmem_limit_bytes=64 << 20,           # tiles are tiny; plenty of headroom
        ),
        cost_estimate=pl.CostEstimate(
            flops=flops, transcendentals=0, bytes_accessed=bytes_accessed),
    )(x_bf, w1_bf, b1p, w2_bf, b2p, w3_bf, b3p)

    # Strip batch padding and lane padding back to the logical (batch, num_actions).
    return out[:batch, :num_actions]


def init_params(key, num_inputs, num_actions, hidden=HIDDEN):
    """PyTorch default Linear init: U(-1/sqrt(fan_in), 1/sqrt(fan_in)).
    Weights stored transposed: (in_features, out_features)."""
    ks = jax.random.split(key, 6)

    def layer(kw, kb, fan_in, fan_out):
        bound = 1.0 / jnp.sqrt(jnp.float32(fan_in))
        w = jax.random.uniform(kw, (fan_in, fan_out), jnp.float32, -bound, bound)
        b = jax.random.uniform(kb, (1, fan_out), jnp.float32, -bound, bound)
        return w, b

    w1, b1 = layer(ks[0], ks[1], num_inputs, hidden)
    w2, b2 = layer(ks[2], ks[3], hidden, hidden)
    w3, b3 = layer(ks[4], ks[5], hidden, num_actions)
    return (w1, b1, w2, b2, w3, b3)


def dqn_reference(x, params, *, mxu_dtype=jnp.float32):
    """Pure-JAX reference.  With mxu_dtype=bfloat16 it mirrors the kernel's dtype
    flow exactly (bf16 matmul inputs, f32 accumulate / elementwise)."""
    w1, b1, w2, b2, w3, b3 = params

    def mm(a, b):
        return jnp.dot(a.astype(mxu_dtype), b.astype(mxu_dtype),
                       preferred_element_type=jnp.float32)

    h1 = jnp.maximum(mm(x, w1) + b1, 0.0)
    h2 = jnp.maximum(mm(h1, w2) + b2, 0.0)
    return mm(h2, w3) + b3


if __name__ == "__main__":
    num_inputs, num_actions = 32, 4

    key = jax.random.PRNGKey(0)
    kx, kp = jax.random.split(key)
    params = init_params(kp, num_inputs, num_actions)

    # Exercise both the single-tile path (batch=8) and the multi-tile + batch-padding
    # path (batch=200 with tile_b=128 -> grid=(2,), padded to 256 rows).
    for batch in (8, 200):
        x = jax.random.normal(jax.random.fold_in(kx, batch),
                              (batch, num_inputs), jnp.float32)

        out = jax.block_until_ready(dqn_forward(x, params, tile_b=128))
        assert out.shape == (batch, num_actions)

        # Reference with the same bf16 MXU / f32 accumulate dtype flow.
        ref_bf16 = dqn_reference(x, params, mxu_dtype=jnp.bfloat16)
        assert jnp.allclose(out, ref_bf16, atol=1e-3, rtol=1e-3), \
            f"mismatch vs bf16 reference (batch={batch})"

        # Full-f32 reference: loose tolerance covers bf16 input rounding only.
        ref_f32 = dqn_reference(x, params, mxu_dtype=jnp.float32)
        assert jnp.allclose(out, ref_f32, atol=5e-2, rtol=5e-2), \
            f"mismatch vs f32 reference (batch={batch})"

    print("KERNEL_OK")
</pallas_src>

<mosaic_0001>
module attributes {stable_mosaic.version = 11 : i64} {
  func.func @dqn_kernel(%arg0: i32, %arg1: memref<8x32xbf16, #tpu.memory_space<vmem>>, %arg2: memref<32x128xbf16, #tpu.memory_space<vmem>>, %arg3: memref<1x128xf32, #tpu.memory_space<vmem>>, %arg4: memref<128x128xbf16, #tpu.memory_space<vmem>>, %arg5: memref<1x128xf32, #tpu.memory_space<vmem>>, %arg6: memref<128x128xbf16, #tpu.memory_space<vmem>>, %arg7: memref<1x128xf32, #tpu.memory_space<vmem>>, %arg8: memref<8x128xf32, #tpu.memory_space<vmem>>) attributes {dimension_semantics = [#tpu.dimension_semantics<parallel>], iteration_bounds = array<i64: 1>, scalar_prefetch = 0 : i64, scratch_operands = 0 : i64, tpu.core_type = #tpu.core_type<tc>, window_params = [{transform_indices = @transform_0, window_bounds = array<i64: 8, 32>}, {pipeline_mode = #tpu.pipeline_mode<synchronous>, transform_indices = @transform_1, window_bounds = array<i64: 32, 128>}, {pipeline_mode = #tpu.pipeline_mode<synchronous>, transform_indices = @transform_2, window_bounds = array<i64: 1, 128>}, {pipeline_mode = #tpu.pipeline_mode<synchronous>, transform_indices = @transform_3, window_bounds = array<i64: 128, 128>}, {pipeline_mode = #tpu.pipeline_mode<synchronous>, transform_indices = @transform_4, window_bounds = array<i64: 1, 128>}, {pipeline_mode = #tpu.pipeline_mode<synchronous>, transform_indices = @transform_5, window_bounds = array<i64: 128, 128>}, {pipeline_mode = #tpu.pipeline_mode<synchronous>, transform_indices = @transform_6, window_bounds = array<i64: 1, 128>}, {transform_indices = @transform_7, window_bounds = array<i64: 8, 128>}]} {
    %c0 = arith.constant 0 : index
    %c0_0 = arith.constant 0 : index
    %0 = vector.load %arg1[%c0, %c0_0] : memref<8x32xbf16, #tpu.memory_space<vmem>>, vector<8x32xbf16>
    %c0_1 = arith.constant 0 : index
    %c0_2 = arith.constant 0 : index
    %1 = vector.load %arg2[%c0_1, %c0_2] : memref<32x128xbf16, #tpu.memory_space<vmem>>, vector<32x128xbf16>
    %cst = arith.constant dense<0.000000e+00> : vector<8x128xf32>
    %2 = tpu.matmul %0, %1, %cst {dimension_numbers = #tpu.dot_dimension_numbers<[1], [0], [0], [1], [0, 0, 1, 1], [], []>} : vector<8x32xbf16>, vector<32x128xbf16>, vector<8x128xf32> -> vector<8x128xf32>
    %c0_3 = arith.constant 0 : index
    %c0_4 = arith.constant 0 : index
    %3 = vector.load %arg3[%c0_3, %c0_4] : memref<1x128xf32, #tpu.memory_space<vmem>>, vector<1x128xf32>
    %4 = vector.broadcast %3 : vector<1x128xf32> to vector<8x128xf32>
    %5 = arith.addf %2, %4 : vector<8x128xf32>
    %cst_5 = arith.constant 0.000000e+00 : f32
    %6 = vector.broadcast %cst_5 : f32 to vector<8x128xf32>
    %7 = arith.maximumf %5, %6 : vector<8x128xf32>
    %8 = arith.truncf %7 : vector<8x128xf32> to vector<8x128xbf16>
    %c0_6 = arith.constant 0 : index
    %c0_7 = arith.constant 0 : index
    %9 = vector.load %arg4[%c0_6, %c0_7] : memref<128x128xbf16, #tpu.memory_space<vmem>>, vector<128x128xbf16>
    %cst_8 = arith.constant dense<0.000000e+00> : vector<8x128xf32>
    %10 = tpu.matmul %8, %9, %cst_8 {dimension_numbers = #tpu.dot_dimension_numbers<[1], [0], [0], [1], [0, 0, 1, 1], [], []>} : vector<8x128xbf16>, vector<128x128xbf16>, vector<8x128xf32> -> vector<8x128xf32>
    %c0_9 = arith.constant 0 : index
    %c0_10 = arith.constant 0 : index
    %11 = vector.load %arg5[%c0_9, %c0_10] : memref<1x128xf32, #tpu.memory_space<vmem>>, vector<1x128xf32>
    %12 = vector.broadcast %11 : vector<1x128xf32> to vector<8x128xf32>
    %13 = arith.addf %10, %12 : vector<8x128xf32>
    %cst_11 = arith.constant 0.000000e+00 : f32
    %14 = vector.broadcast %cst_11 : f32 to vector<8x128xf32>
    %15 = arith.maximumf %13, %14 : vector<8x128xf32>
    %16 = arith.truncf %15 : vector<8x128xf32> to vector<8x128xbf16>
    %c0_12 = arith.constant 0 : index
    %c0_13 = arith.constant 0 : index
    %17 = vector.load %arg6[%c0_12, %c0_13] : memref<128x128xbf16, #tpu.memory_space<vmem>>, vector<128x128xbf16>
    %cst_14 = arith.constant dense<0.000000e+00> : vector<8x128xf32>
    %18 = tpu.matmul %16, %17, %cst_14 {dimension_numbers = #tpu.dot_dimension_numbers<[1], [0], [0], [1], [0, 0, 1, 1], [], []>} : vector<8x128xbf16>, vector<128x128xbf16>, vector<8x128xf32> -> vector<8x128xf32>
    %c0_15 = arith.constant 0 : index
    %c0_16 = arith.constant 0 : index
    %19 = vector.load %arg7[%c0_15, %c0_16] : memref<1x128xf32, #tpu.memory_space<vmem>>, vector<1x128xf32>
    %20 = vector.broadcast %19 : vector<1x128xf32> to vector<8x128xf32>
    %21 = arith.addf %18, %20 : vector<8x128xf32>
    %c0_17 = arith.constant 0 : index
    %c0_18 = arith.constant 0 : index
    %22 = vector.load %arg8[%c0_17, %c0_18] : memref<8x128xf32, #tpu.memory_space<vmem>>, vector<8x128xf32>
    tpu.vector_store %arg8[%c0_17, %c0_18], %21 {strides = array<i32>} : memref<8x128xf32, #tpu.memory_space<vmem>>, vector<8x128xf32>,
    return
  }
  func.func @transform_0(%arg0: i32) -> (i32, i32) {
    %c0_i32 = arith.constant 0 : i32
    %c0_i32_0 = arith.constant 0 : i32
    return %arg0, %c0_i32 : i32, i32
  }
  func.func @transform_1(%arg0: i32) -> (i32, i32) {
    %c0_i32 = arith.constant 0 : i32
    %c0_i32_0 = arith.constant 0 : i32
    %c0_i32_1 = arith.constant 0 : i32
    return %c0_i32, %c0_i32_0 : i32, i32
  }
  func.func @transform_2(%arg0: i32) -> (i32, i32) {
    %c0_i32 = arith.constant 0 : i32
    %c0_i32_0 = arith.constant 0 : i32
    %c0_i32_1 = arith.constant 0 : i32
    return %c0_i32, %c0_i32_0 : i32, i32
  }
  func.func @transform_3(%arg0: i32) -> (i32, i32) {
    %c0_i32 = arith.constant 0 : i32
    %c0_i32_0 = arith.constant 0 : i32
    %c0_i32_1 = arith.constant 0 : i32
    return %c0_i32, %c0_i32_0 : i32, i32
  }
  func.func @transform_4(%arg0: i32) -> (i32, i32) {
    %c0_i32 = arith.constant 0 : i32
    %c0_i32_0 = arith.constant 0 : i32
    %c0_i32_1 = arith.constant 0 : i32
    return %c0_i32, %c0_i32_0 : i32, i32
  }
  func.func @transform_5(%arg0: i32) -> (i32, i32) {
    %c0_i32 = arith.constant 0 : i32
    %c0_i32_0 = arith.constant 0 : i32
    %c0_i32_1 = arith.constant 0 : i32
    return %c0_i32, %c0_i32_0 : i32, i32
  }
  func.func @transform_6(%arg0: i32) -> (i32, i32) {
    %c0_i32 = arith.constant 0 : i32
    %c0_i32_0 = arith.constant 0 : i32
    %c0_i32_1 = arith.constant 0 : i32
    return %c0_i32, %c0_i32_0 : i32, i32
  }
  func.func @transform_7(%arg0: i32) -> (i32, i32) {
    %c0_i32 = arith.constant 0 : i32
    %c0_i32_0 = arith.constant 0 : i32
    return %arg0, %c0_i32 : i32, i32
  }
}

</mosaic_0001>

<llo_original>
// kernel: tpu_custom_call.1
$region0: #{tpu_custom_call.1}
  #allocation0 [shape = 'u32[]', space=smem, size = 0x4, offset = 0x4, fixed_abs, tag = 'smem constant byte address 0x4 - core index']
  #allocation1 [shape = 'u32[144,128]{1,0:T(1,128)}', space=vmem, size = 0x12000, scoped, tag = 'internal scratch']
  %s0 = inlined_call_operand.hbm [shape: bf16[8,32], index: 0, kind: input, shape index: {}]
  %s1 = inlined_call_operand.hbm [shape: bf16[32,128], index: 1, kind: input, shape index: {}]
  %s2 = inlined_call_operand.vmem [shape: f32[1,128], index: 2, kind: input, shape index: {}]
  %s3 = inlined_call_operand.hbm [shape: bf16[128,128], index: 3, kind: input, shape index: {}]
  %s4 = inlined_call_operand.vmem [shape: f32[1,128], index: 4, kind: input, shape index: {}]
  %s5 = inlined_call_operand.hbm [shape: bf16[128,128], index: 5, kind: input, shape index: {}]
  %s6 = inlined_call_operand.vmem [shape: f32[1,128], index: 6, kind: input, shape index: {}]
  %s7 = inlined_call_operand.hbm [shape: f32[8,128], index: 7, kind: output, shape index: {}]
  %s8 = sld [smem:[#allocation0]]
  $region54: #{tpu_custom_call.1} parent=0
    _
  %s10 = ssub.s32 1, %s8
  %s11 = scalar_select 0, %s10, %s8
  $region1: #{tpu_custom_call.1} parent=0
    #allocation2 [shape = 'u8[2048]{0}', space=vmem, size = 0x800, scoped, tag = 'input window, operand 0, single buffered']
    #allocation3 [shape = 's32[1]{0}', space=sflag, size = 0x4, scoped, tag = 'scoped memory for tpu_custom_call.1']
    #allocation4 [shape = 's32[1]{0}', space=sflag, size = 0x4, scoped, tag = 'scoped memory for tpu_custom_call.1']
    #allocation5 [shape = 'u8[8192]{0}', space=vmem, size = 0x2000, scoped, tag = 'input window, operand 1, single buffered']
    #allocation6 [shape = 's32[1]{0}', space=sflag, size = 0x4, scoped, tag = 'scoped memory for tpu_custom_call.1']
    #allocation7 [shape = 'u8[32768]{0}', space=vmem, size = 0x8000, scoped, tag = 'input window, operand 3, single buffered']
    #allocation8 [shape = 'u8[32768]{0}', space=vmem, size = 0x8000, scoped, tag = 'input window, operand 5, single buffered']
    #allocation9 [shape = 's32[1]{0}', space=sflag, size = 0x4, scoped, tag = 'scoped memory for tpu_custom_call.1']
    #allocation10 [shape = 'u8[4096]{0}', space=vmem, size = 0x1000, scoped, tag = 'output window, operand 0, single buffered']
    %12 = vsyncpa [#allocation3], 0
    %13 = vsyncpa [#allocation6], 0
    %14 = vsyncpa [#allocation9], 0
    %15 = vsyncpa [#allocation4], 0
    // Predicated region
    $region2: #{tpu_custom_call.1} parent=1 // pred_check
      _
    $region3: #{tpu_custom_call.1} parent=1 // pred_check_branch
      %17 = sbr.rel (0) target = $region5
    $region4: #{tpu_custom_call.1} parent=1 // pred_region
      %s19 = ssub.s32 64, 64
      %20 = vsyncadd [#allocation3], %s19
      %s22 = sshll.u32 [#allocation2], 4
      %s23 = int_to_ptr.vmem [resolvable:$true] %s22
      %25 = dma.hbm_to_vmem [thread:$0]  %s0, 64, %s23, [#allocation3]
    $region5: #{tpu_custom_call.1} parent=1 // pred_fallthru
      _
    // Predicated region
    $region6: #{tpu_custom_call.1} parent=1 // pred_check
      _
    $region7: #{tpu_custom_call.1} parent=1 // pred_check_branch
      %27 = sbr.rel (0) target = $region9
    $region8: #{tpu_custom_call.1} parent=1 // pred_region
      %s29 = ssub.s32 256, 256
      %30 = vsyncadd [#allocation6], %s29
      %s31 = sshll.u32 [#allocation5], 4
      %s32 = int_to_ptr.vmem [resolvable:$true] %s31
      %37 = dma.hbm_to_vmem [thread:$0]  %s1, 256, %s32, [#allocation6], 64, 64, 4
    $region9: #{tpu_custom_call.1} parent=1 // pred_fallthru
      _
    // Predicated region
    $region10: #{tpu_custom_call.1} parent=1 // pred_check
      _
    $region11: #{tpu_custom_call.1} parent=1 // pred_check_branch
      %39 = sbr.rel (0) target = $region13
    $region12: #{tpu_custom_call.1} parent=1 // pred_region
      _
    $region13: #{tpu_custom_call.1} parent=1 // pred_fallthru
      _
    // Predicated region
    $region14: #{tpu_custom_call.1} parent=1 // pred_check
      _
    $region15: #{tpu_custom_call.1} parent=1 // pred_check_branch
      %41 = sbr.rel (0) target = $region17
    $region16: #{tpu_custom_call.1} parent=1 // pred_region
      %s43 = ssub.s32 1024, 1024
      %44 = vsyncadd [#allocation6], %s43
      %s45 = sshll.u32 [#allocation7], 4
      %s46 = int_to_ptr.vmem [resolvable:$true] %s45
      %51 = dma.hbm_to_vmem [thread:$0]  %s3, 1024, %s46, [#allocation6], 64, 64, 4
    $region17: #{tpu_custom_call.1} parent=1 // pred_fallthru
      _
    // Predicated region
    $region18: #{tpu_custom_call.1} parent=1 // pred_check
      _
    $region19: #{tpu_custom_call.1} parent=1 // pred_check_branch
      %53 = sbr.rel (0) target = $region21
    $region20: #{tpu_custom_call.1} parent=1 // pred_region
      _
    $region21: #{tpu_custom_call.1} parent=1 // pred_fallthru
      _
    // Predicated region
    $region22: #{tpu_custom_call.1} parent=1 // pred_check
      _
    $region23: #{tpu_custom_call.1} parent=1 // pred_check_branch
      %55 = sbr.rel (0) target = $region25
    $region24: #{tpu_custom_call.1} parent=1 // pred_region
      %s57 = ssub.s32 1024, 1024
      %58 = vsyncadd [#allocation9], %s57
      %s59 = sshll.u32 [#allocation8], 4
      %s60 = int_to_ptr.vmem [resolvable:$true] %s59
      %65 = dma.hbm_to_vmem [thread:$0]  %s5, 1024, %s60, [#allocation9], 64, 64, 4
    $region25: #{tpu_custom_call.1} parent=1 // pred_fallthru
      _
    // Predicated region
    $region26: #{tpu_custom_call.1} parent=1 // pred_check
      _
    $region27: #{tpu_custom_call.1} parent=1 // pred_check_branch
      %67 = sbr.rel (0) target = $region29
    $region28: #{tpu_custom_call.1} parent=1 // pred_region
      _
    $region29: #{tpu_custom_call.1} parent=1 // pred_fallthru
      _
    // Predicated region
    $region30: #{tpu_custom_call.1} parent=1 // pred_check
      _
    $region31: #{tpu_custom_call.1} parent=1 // pred_check_branch
      %69 = sbr.rel (0) target = $region33
    $region32: #{tpu_custom_call.1} parent=1 // pred_region
      %70 = dma.done [#allocation3], 64
    $region33: #{tpu_custom_call.1} parent=1 // pred_fallthru
      _
    // Predicated region
    $region34: #{tpu_custom_call.1} parent=1 // pred_check
      _
    $region35: #{tpu_custom_call.1} parent=1 // pred_check_branch
      %72 = sbr.rel (0) target = $region37
    $region36: #{tpu_custom_call.1} parent=1 // pred_region
      %73 = dma.done [#allocation6], 256
    $region37: #{tpu_custom_call.1} parent=1 // pred_fallthru
      _
    // Predicated region
    $region38: #{tpu_custom_call.1} parent=1 // pred_check
      _
    $region39: #{tpu_custom_call.1} parent=1 // pred_check_branch
      %75 = sbr.rel (0) target = $region41
    $region40: #{tpu_custom_call.1} parent=1 // pred_region
      %76 = dma.done [#allocation6], 1024
    $region41: #{tpu_custom_call.1} parent=1 // pred_fallthru
      _
    // Predicated region
    $region42: #{tpu_custom_call.1} parent=1 // pred_check
      _
    $region43: #{tpu_custom_call.1} parent=1 // pred_check_branch
      %78 = sbr.rel (0) target = $region45
    $region44: #{tpu_custom_call.1} parent=1 // pred_region
      %79 = dma.done [#allocation9], 1024
    $region45: #{tpu_custom_call.1} parent=1 // pred_fallthru
      _
    %v81 = vld [vmem:[#allocation2] sm:$0xf]
    %v82 = vld [vmem:[#allocation5] sm:$0xf]
    %v83 = vld [vmem:[#allocation5 + $0x4] sm:$0xf]
    %v84 = vld [vmem:[#allocation5 + $0x8] sm:$0xf]
    %v85 = vld [vmem:[#allocation5 + $0xc] sm:$0xf]
    %v86 = vld [vmem:[%s2] sm:$0x1]
    %v88 = vlaneseq
    %v89 = vshrl.u32 %v88, 7
    %v90 = vsub.s32 0, %v89
    %v91 = vrot.slane %v86, %v90
    %v97 = vunpack.c.l.b16 %v82
    %v98 = vunpack.c.l.b16 %v83
    %v99 = vunpack.c.l.b16 %v84
    %v100 = vunpack.c.l.b16 %v85
    %v101 = vpack.c.b16 %v98, %v97
    %v102 = vpack.c.b16 %v100, %v99
    %vm105 = vcmask 261120
    %v107 = vsel %vm105, %v81, 0
    %109 = vmatprep.subr.bf16.mxu0 0
    %110 = vmatpush1.bf16.msra.mxu0 0
    %111 = vmatprep.subr.bf16.mxu0 0
    %112 = vmatpush1.bf16.msra.mxu0 0
    %113 = vmatprep.subr.bf16.mxu0 0
    %114 = vmatpush1.bf16.msra.mxu0 0
    %115 = vmatprep.subr.bf16.mxu0 0
    %116 = vmatpush1.bf16.msra.mxu0 0
    %117 = vmatprep.subr.bf16.mxu0 0
    %118 = vmatpush1.bf16.msra.mxu0 0
    %119 = vmatprep.subr.bf16.mxu0 0
    %120 = vmatpush1.bf16.msra.mxu0 0
    %121 = vmatprep.subr.bf16.mxu0 0
    %122 = vmatpush1.bf16.msra.mxu0 %v102
    %123 = vmatprep.subr.bf16.mxu0 0
    %124 = vmatpush1.bf16.msra.mxu0 %v101
    %125 = vmatprep.subr.bf16.mxu0 0
    %126 = vmatpush2.bf16.msra.mxu0 0
    %127 = vmatprep.subr.bf16.mxu0 0
    %128 = vmatpush2.bf16.msra.mxu0 0
    %129 = vmatprep.subr.bf16.mxu0 0
    %130 = vmatpush2.bf16.msra.mxu0 0
    %131 = vmatprep.subr.bf16.mxu0 0
    %132 = vmatpush2.bf16.msra.mxu0 0
    %133 = vmatprep.subr.bf16.mxu0 0
    %134 = vmatpush2.bf16.msra.mxu0 0
    %135 = vmatprep.subr.bf16.mxu0 0
    %136 = vmatpush2.bf16.msra.mxu0 0
    %137 = vmatprep.subr.bf16.mxu0 0
    %138 = vmatpush2.bf16.msra.mxu0 0
    %139 = vmatprep.subr.bf16.mxu0 0
    %140 = vmatpush2.bf16.msra.mxu0 0
    %141 = vmatprep.mubr.bf16.mxu0 0
    %142 = vmatmul.mubr.bf16.gmra.mxu0 %v107
    %v143 = vpop.f32.mrf.mxu0
    %v144 = vadd.f32 %v91, %v143
    %v145 = vpop.f32.mrf.mxu0
    %v146 = vpop.f32.mrf.mxu0
    %v147 = vpop.f32.mrf.mxu0
    %148 = vdwg.mxu0
    %v149 = vmax.f32 %v144, 0.0
    %v150 = vpack.c.bf16 %v149, %v149
    %v151 = vld [vmem:[#allocation7] sm:$0xf]
    %v152 = vld [vmem:[#allocation7 + $0x4] sm:$0xf]
    %v153 = vld [vmem:[#allocation7 + $0x8] sm:$0xf]
    %v154 = vld [vmem:[#allocation7 + $0xc] sm:$0xf]
    %v155 = vld [vmem:[#allocation7 + $0x10] sm:$0xf]
    %v156 = vld [vmem:[#allocation7 + $0x14] sm:$0xf]
    %v157 = vld [vmem:[#allocation7 + $0x18] sm:$0xf]
    %v158 = vld [vmem:[#allocation7 + $0x1c] sm:$0xf]
    %v159 = vld [vmem:[#allocation7 + $0x20] sm:$0xf]
    %v160 = vld [vmem:[#allocation7 + $0x24] sm:$0xf]
    %v161 = vld [vmem:[#allocation7 + $0x28] sm:$0xf]
    %v162 = vld [vmem:[#allocation7 + $0x2c] sm:$0xf]
    %v163 = vld [vmem:[#allocation7 + $0x30] sm:$0xf]
    %v164 = vld [vmem:[#allocation7 + $0x34] sm:$0xf]
    %v165 = vld [vmem:[#allocation7 + $0x38] sm:$0xf]
    %v166 = vld [vmem:[#allocation7 + $0x3c] sm:$0xf]
    %v167 = vld [vmem:[%s4] sm:$0x1]
    %v169 = vlaneseq
    %v170 = vshrl.u32 %v169, 7
    %v171 = vsub.s32 0, %v170
    %v172 = vrot.slane %v167, %v171
    %v190 = vunpack.c.l.b16 %v151
    %v191 = vunpack.c.l.b16 %v152
    %v192 = vunpack.c.l.b16 %v153
    %v193 = vunpack.c.l.b16 %v154
    %v194 = vunpack.c.l.b16 %v155
    %v195 = vunpack.c.l.b16 %v156
    %v196 = vunpack.c.l.b16 %v157
    %v197 = vunpack.c.l.b16 %v158
    %v198 = vunpack.c.l.b16 %v159
    %v199 = vunpack.c.l.b16 %v160
    %v200 = vunpack.c.l.b16 %v161
    %v201 = vunpack.c.l.b16 %v162
    %v202 = vunpack.c.l.b16 %v163
    %v203 = vunpack.c.l.b16 %v164
    %v204 = vunpack.c.l.b16 %v165
    %v205 = vunpack.c.l.b16 %v166
    %v206 = vpack.c.b16 %v191, %v190
    %v207 = vpack.c.b16 %v193, %v192
    %v208 = vpack.c.b16 %v195, %v194
    %v209 = vpack.c.b16 %v197, %v196
    %v210 = vpack.c.b16 %v199, %v198
    %v211 = vpack.c.b16 %v201, %v200
    %v212 = vpack.c.b16 %v203, %v202
    %v213 = vpack.c.b16 %v205, %v204
    %222 = vmatprep.subr.bf16.mxu0 0
    %223 = vmatpush1.bf16.msra.mxu0 %v213
    %224 = vmatprep.subr.bf16.mxu0 0
    %225 = vmatpush1.bf16.msra.mxu0 %v212
    %226 = vmatprep.subr.bf16.mxu0 0
    %227 = vmatpush1.bf16.msra.mxu0 %v211
    %228 = vmatprep.subr.bf16.mxu0 0
    %229 = vmatpush1.bf16.msra.mxu0 %v210
    %230 = vmatprep.subr.bf16.mxu0 0
    %231 = vmatpush1.bf16.msra.mxu0 %v209
    %232 = vmatprep.subr.bf16.mxu0 0
    %233 = vmatpush1.bf16.msra.mxu0 %v208
    %234 = vmatprep.subr.bf16.mxu0 0
    %235 = vmatpush1.bf16.msra.mxu0 %v207
    %236 = vmatprep.subr.bf16.mxu0 0
    %237 = vmatpush1.bf16.msra.mxu0 %v206
    %238 = vmatprep.subr.bf16.mxu0 0
    %239 = vmatpush2.bf16.msra.mxu0 0
    %240 = vmatprep.subr.bf16.mxu0 0
    %241 = vmatpush2.bf16.msra.mxu0 0
    %242 = vmatprep.subr.bf16.mxu0 0
    %243 = vmatpush2.bf16.msra.mxu0 0
    %244 = vmatprep.subr.bf16.mxu0 0
    %245 = vmatpush2.bf16.msra.mxu0 0
    %246 = vmatprep.subr.bf16.mxu0 0
    %247 = vmatpush2.bf16.msra.mxu0 0
    %248 = vmatprep.subr.bf16.mxu0 0
    %249 = vmatpush2.bf16.msra.mxu0 0
    %250 = vmatprep.subr.bf16.mxu0 0
    %251 = vmatpush2.bf16.msra.mxu0 0
    %252 = vmatprep.subr.bf16.mxu0 0
    %253 = vmatpush2.bf16.msra.mxu0 0
    %254 = vmatprep.mubr.bf16.mxu0 0
    %255 = vmatmul.mubr.bf16.gmra.mxu0 %v150
    %v256 = vpop.f32.mrf.mxu0
    %v257 = vadd.f32 %v172, %v256
    %v258 = vpop.f32.mrf.mxu0
    %v259 = vpop.f32.mrf.mxu0
    %v260 = vpop.f32.mrf.mxu0
    %261 = vdwg.mxu0
    %v262 = vmax.f32 %v257, 0.0
    %v263 = vpack.c.bf16 %v262, %v262
    %v264 = vld [vmem:[#allocation8] sm:$0xf]
    %v265 = vld [vmem:[#allocation8 + $0x4] sm:$0xf]
    %v266 = vld [vmem:[#allocation8 + $0x8] sm:$0xf]
    %v267 = vld [vmem:[#allocation8 + $0xc] sm:$0xf]
    %v268 = vld [vmem:[#allocation8 + $0x10] sm:$0xf]
    %v269 = vld [vmem:[#allocation8 + $0x14] sm:$0xf]
    %v270 = vld [vmem:[#allocation8 + $0x18] sm:$0xf]
    %v271 = vld [vmem:[#allocation8 + $0x1c] sm:$0xf]
    %v272 = vld [vmem:[#allocation8 + $0x20] sm:$0xf]
    %v273 = vld [vmem:[#allocation8 + $0x24] sm:$0xf]
    %v274 = vld [vmem:[#allocation8 + $0x28] sm:$0xf]
    %v275 = vld [vmem:[#allocation8 + $0x2c] sm:$0xf]
    %v276 = vld [vmem:[#allocation8 + $0x30] sm:$0xf]
    %v277 = vld [vmem:[#allocation8 + $0x34] sm:$0xf]
    %v278 = vld [vmem:[#allocation8 + $0x38] sm:$0xf]
    %v279 = vld [vmem:[#allocation8 + $0x3c] sm:$0xf]
    %v280 = vld [vmem:[%s6] sm:$0x1]
    %v282 = vlaneseq
    %v283 = vshrl.u32 %v282, 7
    %v284 = vsub.s32 0, %v283
    %v285 = vrot.slane %v280, %v284
    %v303 = vunpack.c.l.b16 %v264
    %v304 = vunpack.c.l.b16 %v265
    %v305 = vunpack.c.l.b16 %v266
    %v306 = vunpack.c.l.b16 %v267
    %v307 = vunpack.c.l.b16 %v268
    %v308 = vunpack.c.l.b16 %v269
    %v309 = vunpack.c.l.b16 %v270
    %v310 = vunpack.c.l.b16 %v271
    %v311 = vunpack.c.l.b16 %v272
    %v312 = vunpack.c.l.b16 %v273
    %v313 = vunpack.c.l.b16 %v274
    %v314 = vunpack.c.l.b16 %v275
    %v315 = vunpack.c.l.b16 %v276
    %v316 = vunpack.c.l.b16 %v277
    %v317 = vunpack.c.l.b16 %v278
    %v318 = vunpack.c.l.b16 %v279
    %v319 = vpack.c.b16 %v304, %v303
    %v320 = vpack.c.b16 %v306, %v305
    %v321 = vpack.c.b16 %v308, %v307
    %v322 = vpack.c.b16 %v310, %v309
    %v323 = vpack.c.b16 %v312, %v311
    %v324 = vpack.c.b16 %v314, %v313
    %v325 = vpack.c.b16 %v316, %v315
    %v326 = vpack.c.b16 %v318, %v317
    %335 = vmatprep.subr.bf16.mxu0 0
    %336 = vmatpush1.bf16.msra.mxu0 %v326
    %337 = vmatprep.subr.bf16.mxu0 0
    %338 = vmatpush1.bf16.msra.mxu0 %v325
    %339 = vmatprep.subr.bf16.mxu0 0
    %340 = vmatpush1.bf16.msra.mxu0 %v324
    %341 = vmatprep.subr.bf16.mxu0 0
    %342 = vmatpush1.bf16.msra.mxu0 %v323
    %343 = vmatprep.subr.bf16.mxu0 0
    %344 = vmatpush1.bf16.msra.mxu0 %v322
    %345 = vmatprep.subr.bf16.mxu0 0
    %346 = vmatpush1.bf16.msra.mxu0 %v321
    %347 = vmatprep.subr.bf16.mxu0 0
    %348 = vmatpush1.bf16.msra.mxu0 %v320
    %349 = vmatprep.subr.bf16.mxu0 0
    %350 = vmatpush1.bf16.msra.mxu0 %v319
    %351 = vmatprep.subr.bf16.mxu0 0
    %352 = vmatpush2.bf16.msra.mxu0 0
    %353 = vmatprep.subr.bf16.mxu0 0
    %354 = vmatpush2.bf16.msra.mxu0 0
    %355 = vmatprep.subr.bf16.mxu0 0
    %356 = vmatpush2.bf16.msra.mxu0 0
    %357 = vmatprep.subr.bf16.mxu0 0
    %358 = vmatpush2.bf16.msra.mxu0 0
    %359 = vmatprep.subr.bf16.mxu0 0
    %360 = vmatpush2.bf16.msra.mxu0 0
    %361 = vmatprep.subr.bf16.mxu0 0
    %362 = vmatpush2.bf16.msra.mxu0 0
    %363 = vmatprep.subr.bf16.mxu0 0
    %364 = vmatpush2.bf16.msra.mxu0 0
    %365 = vmatprep.subr.bf16.mxu0 0
    %366 = vmatpush2.bf16.msra.mxu0 0
    %367 = vmatprep.mubr.bf16.mxu0 0
    %368 = vmatmul.mubr.bf16.gmra.mxu0 %v263
    %v369 = vpop.f32.mrf.mxu0
    %v370 = vadd.f32 %v285, %v369
    %v371 = vpop.f32.mrf.mxu0
    %v372 = vpop.f32.mrf.mxu0
    %v373 = vpop.f32.mrf.mxu0
    %374 = vdwg.mxu0
    %375 = vst [vmem:[#allocation10] sm:$0xff] %v370
    // Predicated region
    $region46: #{tpu_custom_call.1} parent=1 // pred_check
      _
    $region47: #{tpu_custom_call.1} parent=1 // pred_check_branch
      %377 = sbr.rel (0) target = $region49
    $region48: #{tpu_custom_call.1} parent=1 // pred_region
      %s379 = ssub.s32 128, 128
      %380 = vsyncadd [#allocation4], %s379
      %s382 = sshll.u32 [#allocation10], 4
      %s383 = int_to_ptr.vmem [resolvable:$true] %s382
      %385 = dma.vmem_to_hbm [thread:$0]  %s383, 128, %s7, [#allocation4]
    $region49: #{tpu_custom_call.1} parent=1 // pred_fallthru
      _
    // Predicated region
    $region50: #{tpu_custom_call.1} parent=1 // pred_check
      _
    $region51: #{tpu_custom_call.1} parent=1 // pred_check_branch
      %387 = sbr.rel (0) target = $region53
    $region52: #{tpu_custom_call.1} parent=1 // pred_region
      %388 = dma.done [#allocation4], 128
    $region53: #{tpu_custom_call.1} parent=1 // pred_fallthru
      _
    %389 = vsyncpa [#allocation3], 1
    %390 = vsyncpa [#allocation6], 1
    %391 = vsyncpa [#allocation9], 1
    %392 = vsyncpa [#allocation4], 1

</llo_original>
